<compile_context>
chip_gen: v7x
topology: tpu7x:2x2x1
jax: 0.10.0
libtpu: 0.0.40
codegen_flags: <defaults>
</compile_context>

<pallas_src>
import functools

import jax
import jax.numpy as jnp
from jax.experimental import pallas as pl
from jax.experimental.pallas import tpu as pltpu


def _round_up(x: int, m: int) -> int:
    return ((x + m - 1) // m) * m


# ----------------------------------------------------------------------------
# Kernel body: plain MLP over one row tile.  refs = (x, w0, b0, ..., wL, bL, o)
# ----------------------------------------------------------------------------
def _mlp_kernel(n_layers, compute_dtype, *refs):
    x_ref = refs[0]
    o_ref = refs[-1]
    wb = refs[1:-1]

    h = x_ref[...]
    for layer in range(n_layers):
        w = wb[2 * layer][...]                              # already compute_dtype
        b = wb[2 * layer + 1][...].astype(jnp.float32)
        h = jnp.dot(h.astype(compute_dtype), w,
                    preferred_element_type=jnp.float32) + b
        if layer != n_layers - 1:                           # ReLU on hidden layers
            h = jnp.maximum(h, 0.0)
    o_ref[...] = h.astype(o_ref.dtype)


# ----------------------------------------------------------------------------
# Wrapper helpers
# ----------------------------------------------------------------------------
def _vmem_tile_bytes(rows: int, cols: int, dtype) -> int:
    """Bytes of one VMEM-resident tile after (8, 128) sublane/lane padding."""
    return _round_up(max(rows, 1), 8) * _round_up(max(cols, 1), 128) * jnp.dtype(dtype).itemsize


def _vmem_capacity_bytes() -> int:
    """Per-TensorCore VMEM capacity; conservative v7x value on failure."""
    try:
        info = pltpu.get_tpu_info()
        cap = getattr(info, "vmem_capacity_bytes", None)
        if cap:
            return int(cap)
    except Exception:
        pass
    return 64 * 1024 * 1024


def _choose_pack(num_edges: int, layer_sizes, max_pack: int = 4) -> int:
    """Block-diagonal replication factor.  Requires exact divisibility of
    num_edges (so the wrapper reshape is a zero-copy bitcast) and keeps every
    packed layer width <= 256 (single MXU pass).  Capped at 4 per review."""
    widest = max(layer_sizes)
    for p in (4, 2):
        if p <= max_pack and num_edges % p == 0 and widest * p <= 256:
            return p
    return 1


def _block_diag(w, p: int):
    if p == 1:
        return w
    fin, fout = w.shape
    out = jnp.zeros((p * fin, p * fout), w.dtype)
    for i in range(p):
        out = out.at[i * fin:(i + 1) * fin, i * fout:(i + 1) * fout].set(w)
    return out


def _choose_tile_rows(n_rows: int, requested: int, min_rows_to_split: int = 1024) -> int:
    """Pick the (packed-)row tile: as large as requested, clamped to the row
    count; split into >= 2 grid steps on big-enough graphs so the 'parallel'
    axis can shard across v7x's two TensorCores.  No 8-step rule."""
    tr = min(int(requested), _round_up(max(n_rows, 1), 8))
    tr = max(8, _round_up(tr, 8))
    if n_rows >= min_rows_to_split and pl.cdiv(n_rows, tr) < 2:
        tr = max(8, _round_up(pl.cdiv(n_rows, 2), 8))
    return tr


# ----------------------------------------------------------------------------
# Public entry point
# ----------------------------------------------------------------------------
def edge_decoder_forward(edge_features, weights, biases, *,
                         tile_rows: int = 16384,
                         compute_dtype=None,
                         vmem_limit_bytes=None,
                         max_pack: int = 4):
    """Run the EdgeDecoder MLP via a single Pallas kernel.

    edge_features: [num_edges, nedge_in]
    weights: list of [in_i, out_i] matrices (pre-transposed vs. PyTorch [out, in])
    biases:  list of [1, out_i] row vectors
    tile_rows: edges per grid step (sweepable; big tiles amortize grid overhead)
    compute_dtype: MXU input dtype.  Defaults to the input dtype; if it differs,
        the cast happens per-tile inside the kernel (no extra HBM pass).  Note a
        non-f32 compute dtype reduces activation precision.
    """
    num_edges, nedge_in = edge_features.shape
    n_layers = len(weights)
    nedge_out = weights[-1].shape[1]
    out_dtype = edge_features.dtype
    if compute_dtype is None:
        compute_dtype = edge_features.dtype

    layer_sizes = [nedge_in] + [w.shape[1] for w in weights]
    pack = _choose_pack(num_edges, layer_sizes, max_pack)

    # Zero-copy view: 'pack' edges per row -> lane-dense loads, wider matmuls.
    n_rows = num_edges // pack
    in_width = pack * nedge_in
    out_width = pack * nedge_out
    x = edge_features.reshape(n_rows, in_width) if pack > 1 else edge_features

    # Parameters: tiny; cast + block-diag replicate once in the wrapper and keep
    # them whole-array resident in VMEM (no per-step DMA, no pipeline buffers).
    params = []
    for w, b in zip(weights, biases):
        params.append(_block_diag(w.astype(compute_dtype), pack))
        params.append(jnp.tile(b, (1, pack)) if pack > 1 else b)

    # ---- tile choice + VMEM budget -----------------------------------------
    tr = _choose_tile_rows(n_rows, max(1, int(tile_rows) // pack))

    capacity = _vmem_capacity_bytes()
    budget = int(capacity * 0.8)            # ~20% headroom for compiler scratch

    widest_act = max(pack * s for s in layer_sizes[1:])

    def _estimate(rows):
        est = 2 * _vmem_tile_bytes(rows, in_width, x.dtype)          # input dbl buf
        est += 2 * _vmem_tile_bytes(rows, out_width, out_dtype)      # output dbl buf
        est += 3 * _vmem_tile_bytes(rows, widest_act, jnp.float32)   # f32 intermediates
        for p in params:
            est += _vmem_tile_bytes(p.shape[0], p.shape[1], p.dtype)
        return est

    # Derive the max tile from this generation's VMEM, not a fixed constant.
    while _estimate(tr) > budget and tr > 512:
        tr = max(8, _round_up(tr // 2, 8))

    if vmem_limit_bytes is None:
        # Sized from the real estimate (+30% margin); floored at the smallest
        # default scoped limit (16 MiB) so we never regress the default.
        vmem_limit_bytes = max(min(int(1.3 * _estimate(tr)), budget), 16 * 1024 * 1024)

    # ---- grid & specs (ragged tail handled by Pallas partial blocks) -------
    grid = (pl.cdiv(n_rows, tr),)

    in_specs = [pl.BlockSpec((tr, in_width), lambda i: (i, 0))]
    param_spec = pl.BlockSpec(memory_space=pltpu.MemorySpace.VMEM)
    in_specs.extend([param_spec] * (2 * n_layers))
    out_spec = pl.BlockSpec((tr, out_width), lambda i: (i, 0))

    kernel = functools.partial(_mlp_kernel, n_layers, compute_dtype)

    out = pl.pallas_call(
        kernel,
        out_shape=jax.ShapeDtypeStruct((n_rows, out_width), out_dtype),
        grid_spec=pltpu.PrefetchScalarGridSpec(
            num_scalar_prefetch=0,
            grid=grid,
            in_specs=in_specs,
            out_specs=out_spec,
        ),
        compiler_params=pltpu.CompilerParams(
            dimension_semantics=("parallel",),
            vmem_limit_bytes=int(vmem_limit_bytes),
        ),
    )(x, *params)

    # Zero-copy reshape back to [num_edges, nedge_out]; no pad, no slice.
    return out.reshape(num_edges, nedge_out) if pack > 1 else out


# ----------------------------------------------------------------------------
# Params init + pure-JAX reference
# ----------------------------------------------------------------------------
def init_edge_decoder_params(key, nedge_in, nedge_out, nmlp_layers, mlp_hidden_dim):
    """Mirror build_mlp layer sizes: [nedge_in] + [mlp_hidden_dim]*nmlp_layers + [nedge_out]."""
    layer_sizes = [nedge_in] + [mlp_hidden_dim] * nmlp_layers + [nedge_out]
    weights, biases = [], []
    for i in range(len(layer_sizes) - 1):
        fan_in, fan_out = layer_sizes[i], layer_sizes[i + 1]
        key, wk, bk = jax.random.split(key, 3)
        bound = 1.0 / jnp.sqrt(fan_in)
        # PyTorch nn.Linear stores W as [out, in]; we keep [in, out] (pre-transposed).
        w = jax.random.uniform(wk, (fan_in, fan_out), jnp.float32, -bound, bound)
        b = jax.random.uniform(bk, (1, fan_out), jnp.float32, -bound, bound)
        weights.append(w)
        biases.append(b)
    return weights, biases


def edge_decoder_reference(edge_features, weights, biases):
    h = edge_features
    n_layers = len(weights)
    for i, (w, b) in enumerate(zip(weights, biases)):
        h = h @ w + b
        if i != n_layers - 1:
            h = jnp.maximum(h, 0.0)
    return h


# ----------------------------------------------------------------------------
# Self-test
# ----------------------------------------------------------------------------
if __name__ == "__main__":
    nedge_in = 32
    nedge_out = 8
    nmlp_layers = 2
    mlp_hidden_dim = 32

    key = jax.random.PRNGKey(0)
    weights, biases = init_edge_decoder_params(
        key, nedge_in, nedge_out, nmlp_layers, mlp_hidden_dim
    )

    # 1) Default config: pack=4 path, single (partial) block — 1000 edges ->
    #    250 packed rows, not a multiple of 8 (exercises sublane tail masking).
    num_edges = 1000
    key, xk = jax.random.split(key)
    edge_features = jax.random.normal(xk, (num_edges, nedge_in), jnp.float32)
    ref = edge_decoder_reference(edge_features, weights, biases)

    out = jax.block_until_ready(edge_decoder_forward(edge_features, weights, biases))
    assert out.shape == (num_edges, nedge_out)
    assert jnp.allclose(out, ref, atol=5e-4, rtol=5e-4), "Pallas mismatch (packed, default tile)"

    # 2) Multi-step grid with ragged tail (256 edges/tile -> 64 packed rows, 4 steps).
    out_tiled = jax.block_until_ready(
        edge_decoder_forward(edge_features, weights, biases, tile_rows=256))
    assert out_tiled.shape == (num_edges, nedge_out)
    assert jnp.allclose(out_tiled, ref, atol=5e-4, rtol=5e-4), "Pallas mismatch (packed, tiled)"

    # 3) Unpacked fallback (999 edges not divisible by 2/4) + partial tail block.
    num_edges_odd = 999
    key, xk2 = jax.random.split(key)
    x_odd = jax.random.normal(xk2, (num_edges_odd, nedge_in), jnp.float32)
    ref_odd = edge_decoder_reference(x_odd, weights, biases)
    out_odd = jax.block_until_ready(
        edge_decoder_forward(x_odd, weights, biases, tile_rows=512))
    assert out_odd.shape == (num_edges_odd, nedge_out)
    assert jnp.allclose(out_odd, ref_odd, atol=5e-4, rtol=5e-4), "Pallas mismatch (unpacked)"

    # 4) Explicit bf16 compute dtype: cast happens per-tile in-kernel (reduced
    #    precision path; only profitable end-to-end if the producer hands bf16).
    out_bf16 = jax.block_until_ready(
        edge_decoder_forward(edge_features, weights, biases, compute_dtype=jnp.bfloat16))
    assert out_bf16.shape == (num_edges, nedge_out)
    assert bool(jnp.all(jnp.isfinite(out_bf16)))

    print("KERNEL_OK")
</pallas_src>

<mosaic_0001>
module attributes {stable_mosaic.version = 11 : i64} {
  func.func @_mlp_kernel(%arg0: i32, %arg1: memref<256x128xf32, #tpu.memory_space<vmem>>, %arg2: memref<128x128xf32, #tpu.memory_space<vmem>>, %arg3: memref<1x128xf32, #tpu.memory_space<vmem>>, %arg4: memref<128x128xf32, #tpu.memory_space<vmem>>, %arg5: memref<1x128xf32, #tpu.memory_space<vmem>>, %arg6: memref<128x32xf32, #tpu.memory_space<vmem>>, %arg7: memref<1x32xf32, #tpu.memory_space<vmem>>, %arg8: memref<256x32xf32, #tpu.memory_space<vmem>>) attributes {dimension_semantics = [#tpu.dimension_semantics<parallel>], iteration_bounds = array<i64: 1>, scalar_prefetch = 0 : i64, scratch_operands = 0 : i64, tpu.core_type = #tpu.core_type<tc>, window_params = [{transform_indices = @transform_0, window_bounds = array<i64: 256, 128>}, {pipeline_mode = #tpu.pipeline_mode<synchronous>, transform_indices = @transform_1, window_bounds = array<i64: 128, 128>}, {pipeline_mode = #tpu.pipeline_mode<synchronous>, transform_indices = @transform_2, window_bounds = array<i64: 1, 128>}, {pipeline_mode = #tpu.pipeline_mode<synchronous>, transform_indices = @transform_3, window_bounds = array<i64: 128, 128>}, {pipeline_mode = #tpu.pipeline_mode<synchronous>, transform_indices = @transform_4, window_bounds = array<i64: 1, 128>}, {pipeline_mode = #tpu.pipeline_mode<synchronous>, transform_indices = @transform_5, window_bounds = array<i64: 128, 32>}, {pipeline_mode = #tpu.pipeline_mode<synchronous>, transform_indices = @transform_6, window_bounds = array<i64: 1, 32>}, {transform_indices = @transform_7, window_bounds = array<i64: 256, 32>}]} {
    %c0 = arith.constant 0 : index
    %c0_0 = arith.constant 0 : index
    %0 = vector.load %arg1[%c0, %c0_0] : memref<256x128xf32, #tpu.memory_space<vmem>>, vector<256x128xf32>
    %c0_1 = arith.constant 0 : index
    %c0_2 = arith.constant 0 : index
    %1 = vector.load %arg2[%c0_1, %c0_2] : memref<128x128xf32, #tpu.memory_space<vmem>>, vector<128x128xf32>
    %c0_3 = arith.constant 0 : index
    %c0_4 = arith.constant 0 : index
    %2 = vector.load %arg3[%c0_3, %c0_4] : memref<1x128xf32, #tpu.memory_space<vmem>>, vector<1x128xf32>
    %cst = arith.constant dense<0.000000e+00> : vector<256x128xf32>
    %3 = tpu.matmul %0, %1, %cst {dimension_numbers = #tpu.dot_dimension_numbers<[1], [0], [0], [1], [0, 0, 1, 1], [], []>} : vector<256x128xf32>, vector<128x128xf32>, vector<256x128xf32> -> vector<256x128xf32>
    %4 = vector.broadcast %2 : vector<1x128xf32> to vector<256x128xf32>
    %5 = arith.addf %3, %4 : vector<256x128xf32>
    %cst_5 = arith.constant 0.000000e+00 : f32
    %6 = vector.broadcast %cst_5 : f32 to vector<256x128xf32>
    %7 = arith.maximumf %5, %6 : vector<256x128xf32>
    %c0_6 = arith.constant 0 : index
    %c0_7 = arith.constant 0 : index
    %8 = vector.load %arg4[%c0_6, %c0_7] : memref<128x128xf32, #tpu.memory_space<vmem>>, vector<128x128xf32>
    %c0_8 = arith.constant 0 : index
    %c0_9 = arith.constant 0 : index
    %9 = vector.load %arg5[%c0_8, %c0_9] : memref<1x128xf32, #tpu.memory_space<vmem>>, vector<1x128xf32>
    %cst_10 = arith.constant dense<0.000000e+00> : vector<256x128xf32>
    %10 = tpu.matmul %7, %8, %cst_10 {dimension_numbers = #tpu.dot_dimension_numbers<[1], [0], [0], [1], [0, 0, 1, 1], [], []>} : vector<256x128xf32>, vector<128x128xf32>, vector<256x128xf32> -> vector<256x128xf32>
    %11 = vector.broadcast %9 : vector<1x128xf32> to vector<256x128xf32>
    %12 = arith.addf %10, %11 : vector<256x128xf32>
    %cst_11 = arith.constant 0.000000e+00 : f32
    %13 = vector.broadcast %cst_11 : f32 to vector<256x128xf32>
    %14 = arith.maximumf %12, %13 : vector<256x128xf32>
    %c0_12 = arith.constant 0 : index
    %c0_13 = arith.constant 0 : index
    %15 = vector.load %arg6[%c0_12, %c0_13] : memref<128x32xf32, #tpu.memory_space<vmem>>, vector<128x32xf32>
    %c0_14 = arith.constant 0 : index
    %c0_15 = arith.constant 0 : index
    %16 = vector.load %arg7[%c0_14, %c0_15] : memref<1x32xf32, #tpu.memory_space<vmem>>, vector<1x32xf32>
    %cst_16 = arith.constant dense<0.000000e+00> : vector<256x32xf32>
    %17 = tpu.matmul %14, %15, %cst_16 {dimension_numbers = #tpu.dot_dimension_numbers<[1], [0], [0], [1], [0, 0, 1, 1], [], []>} : vector<256x128xf32>, vector<128x32xf32>, vector<256x32xf32> -> vector<256x32xf32>
    %18 = vector.broadcast %16 : vector<1x32xf32> to vector<256x32xf32>
    %19 = arith.addf %17, %18 : vector<256x32xf32>
    %c0_17 = arith.constant 0 : index
    %c0_18 = arith.constant 0 : index
    %20 = vector.load %arg8[%c0_17, %c0_18] : memref<256x32xf32, #tpu.memory_space<vmem>>, vector<256x32xf32>
    tpu.vector_store %arg8[%c0_17, %c0_18], %19 {strides = array<i32>} : memref<256x32xf32, #tpu.memory_space<vmem>>, vector<256x32xf32>,
    return
  }
  func.func @transform_0(%arg0: i32) -> (i32, i32) {
    %c0_i32 = arith.constant 0 : i32
    %c0_i32_0 = arith.constant 0 : i32
    return %arg0, %c0_i32 : i32, i32
  }
  func.func @transform_1(%arg0: i32) -> (i32, i32) {
    %c0_i32 = arith.constant 0 : i32
    %c0_i32_0 = arith.constant 0 : i32
    %c0_i32_1 = arith.constant 0 : i32
    return %c0_i32, %c0_i32_0 : i32, i32
  }
  func.func @transform_2(%arg0: i32) -> (i32, i32) {
    %c0_i32 = arith.constant 0 : i32
    %c0_i32_0 = arith.constant 0 : i32
    %c0_i32_1 = arith.constant 0 : i32
    return %c0_i32, %c0_i32_0 : i32, i32
  }
  func.func @transform_3(%arg0: i32) -> (i32, i32) {
    %c0_i32 = arith.constant 0 : i32
    %c0_i32_0 = arith.constant 0 : i32
    %c0_i32_1 = arith.constant 0 : i32
    return %c0_i32, %c0_i32_0 : i32, i32
  }
  func.func @transform_4(%arg0: i32) -> (i32, i32) {
    %c0_i32 = arith.constant 0 : i32
    %c0_i32_0 = arith.constant 0 : i32
    %c0_i32_1 = arith.constant 0 : i32
    return %c0_i32, %c0_i32_0 : i32, i32
  }
  func.func @transform_5(%arg0: i32) -> (i32, i32) {
    %c0_i32 = arith.constant 0 : i32
    %c0_i32_0 = arith.constant 0 : i32
    %c0_i32_1 = arith.constant 0 : i32
    return %c0_i32, %c0_i32_0 : i32, i32
  }
  func.func @transform_6(%arg0: i32) -> (i32, i32) {
    %c0_i32 = arith.constant 0 : i32
    %c0_i32_0 = arith.constant 0 : i32
    %c0_i32_1 = arith.constant 0 : i32
    return %c0_i32, %c0_i32_0 : i32, i32
  }
  func.func @transform_7(%arg0: i32) -> (i32, i32) {
    %c0_i32 = arith.constant 0 : i32
    %c0_i32_0 = arith.constant 0 : i32
    return %arg0, %c0_i32 : i32, i32
  }
}

</mosaic_0001>

<llo_original>
// kernel: tpu_custom_call.1
$region0: #{tpu_custom_call.1}
  #allocation0 [shape = 'u32[]', space=smem, size = 0x4, offset = 0x4, fixed_abs, tag = 'smem constant byte address 0x4 - core index']
  #allocation1 [shape = 'u32[144,128]{1,0:T(1,128)}', space=vmem, size = 0x12000, scoped, tag = 'internal scratch']
  %s0 = inlined_call_operand.hbm [shape: f32[250,128], index: 0, kind: input, shape index: {}]
  %s1 = inlined_call_operand.vmem [shape: f32[128,128], index: 1, kind: input, shape index: {}]
  %s2 = inlined_call_operand.vmem [shape: f32[1,128], index: 2, kind: input, shape index: {}]
  %s3 = inlined_call_operand.hbm [shape: f32[128,128], index: 3, kind: input, shape index: {}]
  %s4 = inlined_call_operand.vmem [shape: f32[1,128], index: 4, kind: input, shape index: {}]
  %s5 = inlined_call_operand.vmem [shape: f32[128,32], index: 5, kind: input, shape index: {}]
  %s6 = inlined_call_operand.vmem [shape: f32[1,32], index: 6, kind: input, shape index: {}]
  %s7 = inlined_call_operand.vmem [shape: f32[250,32], index: 7, kind: output, shape index: {}]
  %s8 = sld [smem:[#allocation0]]
  $region46: #{tpu_custom_call.1} parent=0
    _
  %s10 = ssub.s32 1, %s8
  %s11 = scalar_select 0, %s10, %s8
  $region1: #{tpu_custom_call.1} parent=0
    #allocation2 [shape = 'u8[131072]{0}', space=vmem, size = 0x20000, scoped, tag = 'input window, operand 0, single buffered']
    #allocation3 [shape = 's32[1]{0}', space=sflag, size = 0x4, scoped, tag = 'scoped memory for tpu_custom_call.1']
    #allocation4 [shape = 'u8[65536]{0}', space=vmem, size = 0x10000, scoped, tag = 'input window, operand 3, single buffered']
    #allocation5 [shape = 's32[1]{0}', space=sflag, size = 0x4, scoped, tag = 'scoped memory for tpu_custom_call.1']
    %12 = vsyncpa [#allocation3], 0
    %13 = vsyncpa [#allocation5], 0
    // Predicated region
    $region2: #{tpu_custom_call.1} parent=1 // pred_check
      _
    $region3: #{tpu_custom_call.1} parent=1 // pred_check_branch
      %15 = sbr.rel (0) target = $region5
    $region4: #{tpu_custom_call.1} parent=1 // pred_region
      %s17 = ssub.s32 4096, 4096
      %18 = vsyncadd [#allocation3], %s17
      %s19 = sshll.u32 [#allocation2], 4
      %s20 = int_to_ptr.vmem [resolvable:$true] %s19
      %25 = dma.hbm_to_vmem [thread:$0]  %s0, 4096, %s20, [#allocation3], 128, 128, 8
    $region5: #{tpu_custom_call.1} parent=1 // pred_fallthru
      _
    // Predicated region
    $region6: #{tpu_custom_call.1} parent=1 // pred_check
      _
    $region7: #{tpu_custom_call.1} parent=1 // pred_check_branch
      %27 = sbr.rel (0) target = $region9
    $region8: #{tpu_custom_call.1} parent=1 // pred_region
      _
    $region9: #{tpu_custom_call.1} parent=1 // pred_fallthru
      _
    // Predicated region
    $region10: #{tpu_custom_call.1} parent=1 // pred_check
      _
    $region11: #{tpu_custom_call.1} parent=1 // pred_check_branch
      %29 = sbr.rel (0) target = $region13
    $region12: #{tpu_custom_call.1} parent=1 // pred_region
      _
    $region13: #{tpu_custom_call.1} parent=1 // pred_fallthru
      _
    // Predicated region
    $region14: #{tpu_custom_call.1} parent=1 // pred_check
      _
    $region15: #{tpu_custom_call.1} parent=1 // pred_check_branch
      %31 = sbr.rel (0) target = $region17
    $region16: #{tpu_custom_call.1} parent=1 // pred_region
      %s33 = ssub.s32 2048, 2048
      %34 = vsyncadd [#allocation5], %s33
      %s35 = sshll.u32 [#allocation4], 4
      %s36 = int_to_ptr.vmem [resolvable:$true] %s35
      %41 = dma.hbm_to_vmem [thread:$0]  %s3, 2048, %s36, [#allocation5], 128, 128, 8
    $region17: #{tpu_custom_call.1} parent=1 // pred_fallthru
      _
    // Predicated region
    $region18: #{tpu_custom_call.1} parent=1 // pred_check
      _
    $region19: #{tpu_custom_call.1} parent=1 // pred_check_branch
      %43 = sbr.rel (0) target = $region21
    $region20: #{tpu_custom_call.1} parent=1 // pred_region
      _
    $region21: #{tpu_custom_call.1} parent=1 // pred_fallthru
      _
    // Predicated region
    $region22: #{tpu_custom_call.1} parent=1 // pred_check
      _
    $region23: #{tpu_custom_call.1} parent=1 // pred_check_branch
      %45 = sbr.rel (0) target = $region25
    $region24: #{tpu_custom_call.1} parent=1 // pred_region
      _
    $region25: #{tpu_custom_call.1} parent=1 // pred_fallthru
      _
    // Predicated region
    $region26: #{tpu_custom_call.1} parent=1 // pred_check
      _
    $region27: #{tpu_custom_call.1} parent=1 // pred_check_branch
      %47 = sbr.rel (0) target = $region29
    $region28: #{tpu_custom_call.1} parent=1 // pred_region
      _
    $region29: #{tpu_custom_call.1} parent=1 // pred_fallthru
      _
    // Predicated region
    $region30: #{tpu_custom_call.1} parent=1 // pred_check
      _
    $region31: #{tpu_custom_call.1} parent=1 // pred_check_branch
      %49 = sbr.rel (0) target = $region33
    $region32: #{tpu_custom_call.1} parent=1 // pred_region
      %50 = dma.done [#allocation3], 4096
    $region33: #{tpu_custom_call.1} parent=1 // pred_fallthru
      _
    // Predicated region
    $region34: #{tpu_custom_call.1} parent=1 // pred_check
      _
    $region35: #{tpu_custom_call.1} parent=1 // pred_check_branch
      %52 = sbr.rel (0) target = $region37
    $region36: #{tpu_custom_call.1} parent=1 // pred_region
      %53 = dma.done [#allocation5], 2048
    $region37: #{tpu_custom_call.1} parent=1 // pred_fallthru
      _
    %v54 = vld [vmem:[#allocation2] sm:$0xff]
    %v55 = vld [vmem:[#allocation2 + $0x8] sm:$0xff]
    %v56 = vld [vmem:[#allocation2 + $0x10] sm:$0xff]
    %v57 = vld [vmem:[#allocation2 + $0x18] sm:$0xff]
    %v58 = vld [vmem:[#allocation2 + $0x20] sm:$0xff]
    %v59 = vld [vmem:[#allocation2 + $0x28] sm:$0xff]
    %v60 = vld [vmem:[#allocation2 + $0x30] sm:$0xff]
    %v61 = vld [vmem:[#allocation2 + $0x38] sm:$0xff]
    %v62 = vld [vmem:[#allocation2 + $0x40] sm:$0xff]
    %v63 = vld [vmem:[#allocation2 + $0x48] sm:$0xff]
    %v64 = vld [vmem:[#allocation2 + $0x50] sm:$0xff]
    %v65 = vld [vmem:[#allocation2 + $0x58] sm:$0xff]
    %v66 = vld [vmem:[#allocation2 + $0x60] sm:$0xff]
    %v67 = vld [vmem:[#allocation2 + $0x68] sm:$0xff]
    %v68 = vld [vmem:[#allocation2 + $0x70] sm:$0xff]
    %v69 = vld [vmem:[#allocation2 + $0x78] sm:$0xff]
    %v70 = vld [vmem:[#allocation2 + $0x80] sm:$0xff]
    %v71 = vld [vmem:[#allocation2 + $0x88] sm:$0xff]
    %v72 = vld [vmem:[#allocation2 + $0x90] sm:$0xff]
    %v73 = vld [vmem:[#allocation2 + $0x98] sm:$0xff]
    %v74 = vld [vmem:[#allocation2 + $0xa0] sm:$0xff]
    %v75 = vld [vmem:[#allocation2 + $0xa8] sm:$0xff]
    %v76 = vld [vmem:[#allocation2 + $0xb0] sm:$0xff]
    %v77 = vld [vmem:[#allocation2 + $0xb8] sm:$0xff]
    %v78 = vld [vmem:[#allocation2 + $0xc0] sm:$0xff]
    %v79 = vld [vmem:[#allocation2 + $0xc8] sm:$0xff]
    %v80 = vld [vmem:[#allocation2 + $0xd0] sm:$0xff]
    %v81 = vld [vmem:[#allocation2 + $0xd8] sm:$0xff]
    %v82 = vld [vmem:[#allocation2 + $0xe0] sm:$0xff]
    %v83 = vld [vmem:[#allocation2 + $0xe8] sm:$0xff]
    %v84 = vld [vmem:[#allocation2 + $0xf0] sm:$0xff]
    %v85 = vld [vmem:[#allocation2 + $0xf8] sm:$0xff]
    %v86 = vld [vmem:[%s1] sm:$0xff]
    %v87 = vld [vmem:[%s1 + $0x8] sm:$0xff]
    %v88 = vld [vmem:[%s1 + $0x10] sm:$0xff]
    %v89 = vld [vmem:[%s1 + $0x18] sm:$0xff]
    %v90 = vld [vmem:[%s1 + $0x20] sm:$0xff]
    %v91 = vld [vmem:[%s1 + $0x28] sm:$0xff]
    %v92 = vld [vmem:[%s1 + $0x30] sm:$0xff]
    %v93 = vld [vmem:[%s1 + $0x38] sm:$0xff]
    %v94 = vld [vmem:[%s1 + $0x40] sm:$0xff]
    %v95 = vld [vmem:[%s1 + $0x48] sm:$0xff]
    %v96 = vld [vmem:[%s1 + $0x50] sm:$0xff]
    %v97 = vld [vmem:[%s1 + $0x58] sm:$0xff]
    %v98 = vld [vmem:[%s1 + $0x60] sm:$0xff]
    %v99 = vld [vmem:[%s1 + $0x68] sm:$0xff]
    %v100 = vld [vmem:[%s1 + $0x70] sm:$0xff]
    %v101 = vld [vmem:[%s1 + $0x78] sm:$0xff]
    %v102 = vld [vmem:[%s2] sm:$0x1]
    %v104 = vlaneseq
    %v105 = vshrl.u32 %v104, 7
    %v106 = vsub.s32 0, %v105
    %v107 = vrot.slane %v102, %v106
    %109 = vmatprep.subr.mxu0 0.0
    %110 = vmatpush1.msra.mxu0 %v86
    %111 = vmatprep.subr.mxu0 0.0
    %112 = vmatpush1.msra.mxu0 %v87
    %113 = vmatprep.subr.mxu0 0.0
    %114 = vmatpush1.msra.mxu0 %v88
    %115 = vmatprep.subr.mxu0 0.0
    %116 = vmatpush1.msra.mxu0 %v89
    %117 = vmatprep.subr.mxu0 0.0
    %118 = vmatpush1.msra.mxu0 %v90
    %119 = vmatprep.subr.mxu0 0.0
    %120 = vmatpush1.msra.mxu0 %v91
    %121 = vmatprep.subr.mxu0 0.0
    %122 = vmatpush1.msra.mxu0 %v92
    %123 = vmatprep.subr.mxu0 0.0
    %124 = vmatpush1.msra.mxu0 %v93
    %125 = vmatprep.subr.mxu0 0.0
    %126 = vmatpush1.msra.mxu0 %v94
    %127 = vmatprep.subr.mxu0 0.0
    %128 = vmatpush1.msra.mxu0 %v95
    %129 = vmatprep.subr.mxu0 0.0
    %130 = vmatpush1.msra.mxu0 %v96
    %131 = vmatprep.subr.mxu0 0.0
    %132 = vmatpush1.msra.mxu0 %v97
    %133 = vmatprep.subr.mxu0 0.0
    %134 = vmatpush1.msra.mxu0 %v98
    %135 = vmatprep.subr.mxu0 0.0
    %136 = vmatpush1.msra.mxu0 %v99
    %137 = vmatprep.subr.mxu0 0.0
    %138 = vmatpush1.msra.mxu0 %v100
    %139 = vmatprep.subr.mxu0 0.0
    %140 = vmatpush1.msra.mxu0 %v101
    %141 = vmatprep.subr.mxu0 0.0
    %142 = vmatpush1.msra.mxu0 0.0
    %143 = vmatprep.subr.mxu0 0.0
    %144 = vmatpush1.msra.mxu0 0.0
    %145 = vmatprep.subr.mxu0 0.0
    %146 = vmatpush1.msra.mxu0 0.0
    %147 = vmatprep.subr.mxu0 0.0
    %148 = vmatpush1.msra.mxu0 0.0
    %149 = vmatprep.subr.mxu0 0.0
    %150 = vmatpush1.msra.mxu0 0.0
    %151 = vmatprep.subr.mxu0 0.0
    %152 = vmatpush1.msra.mxu0 0.0
    %153 = vmatprep.subr.mxu0 0.0
    %154 = vmatpush1.msra.mxu0 0.0
    %155 = vmatprep.subr.mxu0 0.0
    %156 = vmatpush1.msra.mxu0 0.0
    %157 = vmatprep.subr.mxu0 0.0
    %158 = vmatpush1.msra.mxu0 0.0
    %159 = vmatprep.subr.mxu0 0.0
    %160 = vmatpush1.msra.mxu0 0.0
    %161 = vmatprep.subr.mxu0 0.0
    %162 = vmatpush1.msra.mxu0 0.0
    %163 = vmatprep.subr.mxu0 0.0
    %164 = vmatpush1.msra.mxu0 0.0
    %165 = vmatprep.subr.mxu0 0.0
    %166 = vmatpush1.msra.mxu0 0.0
    %167 = vmatprep.subr.mxu0 0.0
    %168 = vmatpush1.msra.mxu0 0.0
    %169 = vmatprep.subr.mxu0 0.0
    %170 = vmatpush1.msra.mxu0 0.0
    %171 = vmatprep.subr.mxu0 0.0
    %172 = vmatpush1.msra.mxu0 0.0
    %173 = vmatprep.mubr.f32.mxu0 0.0
    %174 = vmatmul.mubr.f32.gmra.mrb[0].mxu0 %v54
    %v175 = vpop.f32.mrb[0].mxu0
    %v176 = vadd.f32 %v107, %v175
    %v177 = vpop.f32.mrb[0].mxu0
    %178 = vmatprep.mubr.f32.mxu0 0.0
    %179 = vmatmul.mubr.f32.gmra.mrb[0].mxu0 %v55
    %v180 = vpop.f32.mrb[0].mxu0
    %v181 = vadd.f32 %v107, %v180
    %v182 = vpop.f32.mrb[0].mxu0
    %183 = vmatprep.mubr.f32.mxu0 0.0
    %184 = vmatmul.mubr.f32.gmra.mrb[0].mxu0 %v56
    %v185 = vpop.f32.mrb[0].mxu0
    %v186 = vadd.f32 %v107, %v185
    %v187 = vpop.f32.mrb[0].mxu0
    %188 = vmatprep.mubr.f32.mxu0 0.0
    %189 = vmatmul.mubr.f32.gmra.mrb[0].mxu0 %v57
    %v190 = vpop.f32.mrb[0].mxu0
    %v191 = vadd.f32 %v107, %v190
    %v192 = vpop.f32.mrb[0].mxu0
    %193 = vmatprep.mubr.f32.mxu0 0.0
    %194 = vmatmul.mubr.f32.gmra.mrb[0].mxu0 %v58
    %v195 = vpop.f32.mrb[0].mxu0
    %v196 = vadd.f32 %v107, %v195
    %v197 = vpop.f32.mrb[0].mxu0
    %198 = vmatprep.mubr.f32.mxu0 0.0
    %199 = vmatmul.mubr.f32.gmra.mrb[0].mxu0 %v59
    %v200 = vpop.f32.mrb[0].mxu0
    %v201 = vadd.f32 %v107, %v200
    %v202 = vpop.f32.mrb[0].mxu0
    %203 = vmatprep.mubr.f32.mxu0 0.0
    %204 = vmatmul.mubr.f32.gmra.mrb[0].mxu0 %v60
    %v205 = vpop.f32.mrb[0].mxu0
    %v206 = vadd.f32 %v107, %v205
    %v207 = vpop.f32.mrb[0].mxu0
    %208 = vmatprep.mubr.f32.mxu0 0.0
    %209 = vmatmul.mubr.f32.gmra.mrb[0].mxu0 %v61
    %v210 = vpop.f32.mrb[0].mxu0
    %v211 = vadd.f32 %v107, %v210
    %v212 = vpop.f32.mrb[0].mxu0
    %213 = vmatprep.mubr.f32.mxu0 0.0
    %214 = vmatmul.mubr.f32.gmra.mrb[0].mxu0 %v62
    %v215 = vpop.f32.mrb[0].mxu0
    %v216 = vadd.f32 %v107, %v215
    %v217 = vpop.f32.mrb[0].mxu0
    %218 = vmatprep.mubr.f32.mxu0 0.0
    %219 = vmatmul.mubr.f32.gmra.mrb[0].mxu0 %v63
    %v220 = vpop.f32.mrb[0].mxu0
    %v221 = vadd.f32 %v107, %v220
    %v222 = vpop.f32.mrb[0].mxu0
    %223 = vmatprep.mubr.f32.mxu0 0.0
    %224 = vmatmul.mubr.f32.gmra.mrb[0].mxu0 %v64
    %v225 = vpop.f32.mrb[0].mxu0
    %v226 = vadd.f32 %v107, %v225
    %v227 = vpop.f32.mrb[0].mxu0
    %228 = vmatprep.mubr.f32.mxu0 0.0
    %229 = vmatmul.mubr.f32.gmra.mrb[0].mxu0 %v65
    %v230 = vpop.f32.mrb[0].mxu0
    %v231 = vadd.f32 %v107, %v230
    %v232 = vpop.f32.mrb[0].mxu0
    %233 = vmatprep.mubr.f32.mxu0 0.0
    %234 = vmatmul.mubr.f32.gmra.mrb[0].mxu0 %v66
    %v235 = vpop.f32.mrb[0].mxu0
    %v236 = vadd.f32 %v107, %v235
    %v237 = vpop.f32.mrb[0].mxu0
    %238 = vmatprep.mubr.f32.mxu0 0.0
    %239 = vmatmul.mubr.f32.gmra.mrb[0].mxu0 %v67
    %v240 = vpop.f32.mrb[0].mxu0
    %v241 = vadd.f32 %v107, %v240
    %v242 = vpop.f32.mrb[0].mxu0
    %243 = vmatprep.mubr.f32.mxu0 0.0
    %244 = vmatmul.mubr.f32.gmra.mrb[0].mxu0 %v68
    %v245 = vpop.f32.mrb[0].mxu0
    %v246 = vadd.f32 %v107, %v245
    %v247 = vpop.f32.mrb[0].mxu0
    %248 = vmatprep.mubr.f32.mxu0 0.0
    %249 = vmatmul.mubr.f32.gmra.mrb[0].mxu0 %v69
    %v250 = vpop.f32.mrb[0].mxu0
    %v251 = vadd.f32 %v107, %v250
    %v252 = vpop.f32.mrb[0].mxu0
    %253 = vmatprep.mubr.f32.mxu0 0.0
    %254 = vmatmul.mubr.f32.gmra.mrb[0].mxu0 %v70
    %v255 = vpop.f32.mrb[0].mxu0
    %v256 = vadd.f32 %v107, %v255
    %v257 = vpop.f32.mrb[0].mxu0
    %258 = vmatprep.mubr.f32.mxu0 0.0
    %259 = vmatmul.mubr.f32.gmra.mrb[0].mxu0 %v71
    %v260 = vpop.f32.mrb[0].mxu0
    %v261 = vadd.f32 %v107, %v260
    %v262 = vpop.f32.mrb[0].mxu0
    %263 = vmatprep.mubr.f32.mxu0 0.0
    %264 = vmatmul.mubr.f32.gmra.mrb[0].mxu0 %v72
    %v265 = vpop.f32.mrb[0].mxu0
    %v266 = vadd.f32 %v107, %v265
    %v267 = vpop.f32.mrb[0].mxu0
    %268 = vmatprep.mubr.f32.mxu0 0.0
    %269 = vmatmul.mubr.f32.gmra.mrb[0].mxu0 %v73
    %v270 = vpop.f32.mrb[0].mxu0
    %v271 = vadd.f32 %v107, %v270
    %v272 = vpop.f32.mrb[0].mxu0
    %273 = vmatprep.mubr.f32.mxu0 0.0
    %274 = vmatmul.mubr.f32.gmra.mrb[0].mxu0 %v74
    %v275 = vpop.f32.mrb[0].mxu0
    %v276 = vadd.f32 %v107, %v275
    %v277 = vpop.f32.mrb[0].mxu0
    %278 = vmatprep.mubr.f32.mxu0 0.0
    %279 = vmatmul.mubr.f32.gmra.mrb[0].mxu0 %v75
    %v280 = vpop.f32.mrb[0].mxu0
    %v281 = vadd.f32 %v107, %v280
    %v282 = vpop.f32.mrb[0].mxu0
    %283 = vmatprep.mubr.f32.mxu0 0.0
    %284 = vmatmul.mubr.f32.gmra.mrb[0].mxu0 %v76
    %v285 = vpop.f32.mrb[0].mxu0
    %v286 = vadd.f32 %v107, %v285
    %v287 = vpop.f32.mrb[0].mxu0
    %288 = vmatprep.mubr.f32.mxu0 0.0
    %289 = vmatmul.mubr.f32.gmra.mrb[0].mxu0 %v77
    %v290 = vpop.f32.mrb[0].mxu0
    %v291 = vadd.f32 %v107, %v290
    %v292 = vpop.f32.mrb[0].mxu0
    %293 = vmatprep.mubr.f32.mxu0 0.0
    %294 = vmatmul.mubr.f32.gmra.mrb[0].mxu0 %v78
    %v295 = vpop.f32.mrb[0].mxu0
    %v296 = vadd.f32 %v107, %v295
    %v297 = vpop.f32.mrb[0].mxu0
    %298 = vmatprep.mubr.f32.mxu0 0.0
    %299 = vmatmul.mubr.f32.gmra.mrb[0].mxu0 %v79
    %v300 = vpop.f32.mrb[0].mxu0
    %v301 = vadd.f32 %v107, %v300
    %v302 = vpop.f32.mrb[0].mxu0
    %303 = vmatprep.mubr.f32.mxu0 0.0
    %304 = vmatmul.mubr.f32.gmra.mrb[0].mxu0 %v80
    %v305 = vpop.f32.mrb[0].mxu0
    %v306 = vadd.f32 %v107, %v305
    %v307 = vpop.f32.mrb[0].mxu0
    %308 = vmatprep.mubr.f32.mxu0 0.0
    %309 = vmatmul.mubr.f32.gmra.mrb[0].mxu0 %v81
    %v310 = vpop.f32.mrb[0].mxu0
    %v311 = vadd.f32 %v107, %v310
    %v312 = vpop.f32.mrb[0].mxu0
    %313 = vmatprep.mubr.f32.mxu0 0.0
    %314 = vmatmul.mubr.f32.gmra.mrb[0].mxu0 %v82
    %v315 = vpop.f32.mrb[0].mxu0
    %v316 = vadd.f32 %v107, %v315
    %v317 = vpop.f32.mrb[0].mxu0
    %318 = vmatprep.mubr.f32.mxu0 0.0
    %319 = vmatmul.mubr.f32.gmra.mrb[0].mxu0 %v83
    %v320 = vpop.f32.mrb[0].mxu0
    %v321 = vadd.f32 %v107, %v320
    %v322 = vpop.f32.mrb[0].mxu0
    %323 = vmatprep.mubr.f32.mxu0 0.0
    %324 = vmatmul.mubr.f32.gmra.mrb[0].mxu0 %v84
    %v325 = vpop.f32.mrb[0].mxu0
    %v326 = vadd.f32 %v107, %v325
    %v327 = vpop.f32.mrb[0].mxu0
    %328 = vmatprep.mubr.f32.mxu0 0.0
    %329 = vmatmul.mubr.f32.gmra.mrb[0].mxu0 %v85
    %v330 = vpop.f32.mrb[0].mxu0
    %v331 = vadd.f32 %v107, %v330
    %v332 = vpop.f32.mrb[0].mxu0
    %333 = vdwg.mxu0
    %v334 = vmax.f32 %v176, 0.0
    %v335 = vmax.f32 %v181, 0.0
    %v336 = vmax.f32 %v186, 0.0
    %v337 = vmax.f32 %v191, 0.0
    %v338 = vmax.f32 %v196, 0.0
    %v339 = vmax.f32 %v201, 0.0
    %v340 = vmax.f32 %v206, 0.0
    %v341 = vmax.f32 %v211, 0.0
    %v342 = vmax.f32 %v216, 0.0
    %v343 = vmax.f32 %v221, 0.0
    %v344 = vmax.f32 %v226, 0.0
    %v345 = vmax.f32 %v231, 0.0
    %v346 = vmax.f32 %v236, 0.0
    %v347 = vmax.f32 %v241, 0.0
    %v348 = vmax.f32 %v246, 0.0
    %v349 = vmax.f32 %v251, 0.0
    %v350 = vmax.f32 %v256, 0.0
    %v351 = vmax.f32 %v261, 0.0
    %v352 = vmax.f32 %v266, 0.0
    %v353 = vmax.f32 %v271, 0.0
    %v354 = vmax.f32 %v276, 0.0
    %v355 = vmax.f32 %v281, 0.0
    %v356 = vmax.f32 %v286, 0.0
    %v357 = vmax.f32 %v291, 0.0
    %v358 = vmax.f32 %v296, 0.0
    %v359 = vmax.f32 %v301, 0.0
    %v360 = vmax.f32 %v306, 0.0
    %v361 = vmax.f32 %v311, 0.0
    %v362 = vmax.f32 %v316, 0.0
    %v363 = vmax.f32 %v321, 0.0
    %v364 = vmax.f32 %v326, 0.0
    %v365 = vmax.f32 %v331, 0.0
    %v366 = vld [vmem:[#allocation4] sm:$0xff]
    %v367 = vld [vmem:[#allocation4 + $0x8] sm:$0xff]
    %v368 = vld [vmem:[#allocation4 + $0x10] sm:$0xff]
    %v369 = vld [vmem:[#allocation4 + $0x18] sm:$0xff]
    %v370 = vld [vmem:[#allocation4 + $0x20] sm:$0xff]
    %v371 = vld [vmem:[#allocation4 + $0x28] sm:$0xff]
    %v372 = vld [vmem:[#allocation4 + $0x30] sm:$0xff]
    %v373 = vld [vmem:[#allocation4 + $0x38] sm:$0xff]
    %v374 = vld [vmem:[#allocation4 + $0x40] sm:$0xff]
    %v375 = vld [vmem:[#allocation4 + $0x48] sm:$0xff]
    %v376 = vld [vmem:[#allocation4 + $0x50] sm:$0xff]
    %v377 = vld [vmem:[#allocation4 + $0x58] sm:$0xff]
    %v378 = vld [vmem:[#allocation4 + $0x60] sm:$0xff]
    %v379 = vld [vmem:[#allocation4 + $0x68] sm:$0xff]
    %v380 = vld [vmem:[#allocation4 + $0x70] sm:$0xff]
    %v381 = vld [vmem:[#allocation4 + $0x78] sm:$0xff]
    %v382 = vld [vmem:[%s4] sm:$0x1]
    %v384 = vlaneseq
    %v385 = vshrl.u32 %v384, 7
    %v386 = vsub.s32 0, %v385
    %v387 = vrot.slane %v382, %v386
    %389 = vmatprep.subr.mxu0 0.0
    %390 = vmatpush1.msra.mxu0 %v366
    %391 = vmatprep.subr.mxu0 0.0
    %392 = vmatpush1.msra.mxu0 %v367
    %393 = vmatprep.subr.mxu0 0.0
    %394 = vmatpush1.msra.mxu0 %v368
    %395 = vmatprep.subr.mxu0 0.0
    %396 = vmatpush1.msra.mxu0 %v369
    %397 = vmatprep.subr.mxu0 0.0
    %398 = vmatpush1.msra.mxu0 %v370
    %399 = vmatprep.subr.mxu0 0.0
    %400 = vmatpush1.msra.mxu0 %v371
    %401 = vmatprep.subr.mxu0 0.0
    %402 = vmatpush1.msra.mxu0 %v372
    %403 = vmatprep.subr.mxu0 0.0
    %404 = vmatpush1.msra.mxu0 %v373
    %405 = vmatprep.subr.mxu0 0.0
    %406 = vmatpush1.msra.mxu0 %v374
    %407 = vmatprep.subr.mxu0 0.0
    %408 = vmatpush1.msra.mxu0 %v375
    %409 = vmatprep.subr.mxu0 0.0
    %410 = vmatpush1.msra.mxu0 %v376
    %411 = vmatprep.subr.mxu0 0.0
    %412 = vmatpush1.msra.mxu0 %v377
    %413 = vmatprep.subr.mxu0 0.0
    %414 = vmatpush1.msra.mxu0 %v378
    %415 = vmatprep.subr.mxu0 0.0
    %416 = vmatpush1.msra.mxu0 %v379
    %417 = vmatprep.subr.mxu0 0.0
    %418 = vmatpush1.msra.mxu0 %v380
    %419 = vmatprep.subr.mxu0 0.0
    %420 = vmatpush1.msra.mxu0 %v381
    %421 = vmatprep.subr.mxu0 0.0
    %422 = vmatpush1.msra.mxu0 0.0
    %423 = vmatprep.subr.mxu0 0.0
    %424 = vmatpush1.msra.mxu0 0.0
    %425 = vmatprep.subr.mxu0 0.0
    %426 = vmatpush1.msra.mxu0 0.0
    %427 = vmatprep.subr.mxu0 0.0
    %428 = vmatpush1.msra.mxu0 0.0
    %429 = vmatprep.subr.mxu0 0.0
    %430 = vmatpush1.msra.mxu0 0.0
    %431 = vmatprep.subr.mxu0 0.0
    %432 = vmatpush1.msra.mxu0 0.0
    %433 = vmatprep.subr.mxu0 0.0
    %434 = vmatpush1.msra.mxu0 0.0
    %435 = vmatprep.subr.mxu0 0.0
    %436 = vmatpush1.msra.mxu0 0.0
    %437 = vmatprep.subr.mxu0 0.0
    %438 = vmatpush1.msra.mxu0 0.0
    %439 = vmatprep.subr.mxu0 0.0
    %440 = vmatpush1.msra.mxu0 0.0
    %441 = vmatprep.subr.mxu0 0.0
    %442 = vmatpush1.msra.mxu0 0.0
    %443 = vmatprep.subr.mxu0 0.0
    %444 = vmatpush1.msra.mxu0 0.0
    %445 = vmatprep.subr.mxu0 0.0
    %446 = vmatpush1.msra.mxu0 0.0
    %447 = vmatprep.subr.mxu0 0.0
    %448 = vmatpush1.msra.mxu0 0.0
    %449 = vmatprep.subr.mxu0 0.0
    %450 = vmatpush1.msra.mxu0 0.0
    %451 = vmatprep.subr.mxu0 0.0
    %452 = vmatpush1.msra.mxu0 0.0
    %453 = vmatprep.mubr.f32.mxu0 0.0
    %454 = vmatmul.mubr.f32.gmra.mrb[0].mxu0 %v334
    %v455 = vpop.f32.mrb[0].mxu0
    %v456 = vadd.f32 %v387, %v455
    %v457 = vpop.f32.mrb[0].mxu0
    %458 = vmatprep.mubr.f32.mxu0 0.0
    %459 = vmatmul.mubr.f32.gmra.mrb[0].mxu0 %v335
    %v460 = vpop.f32.mrb[0].mxu0
    %v461 = vadd.f32 %v387, %v460
    %v462 = vpop.f32.mrb[0].mxu0
    %463 = vmatprep.mubr.f32.mxu0 0.0
    %464 = vmatmul.mubr.f32.gmra.mrb[0].mxu0 %v336
    %v465 = vpop.f32.mrb[0].mxu0
    %v466 = vadd.f32 %v387, %v465
    %v467 = vpop.f32.mrb[0].mxu0
    %468 = vmatprep.mubr.f32.mxu0 0.0
    %469 = vmatmul.mubr.f32.gmra.mrb[0].mxu0 %v337
    %v470 = vpop.f32.mrb[0].mxu0
    %v471 = vadd.f32 %v387, %v470
    %v472 = vpop.f32.mrb[0].mxu0
    %473 = vmatprep.mubr.f32.mxu0 0.0
    %474 = vmatmul.mubr.f32.gmra.mrb[0].mxu0 %v338
    %v475 = vpop.f32.mrb[0].mxu0
    %v476 = vadd.f32 %v387, %v475
    %v477 = vpop.f32.mrb[0].mxu0
    %478 = vmatprep.mubr.f32.mxu0 0.0
    %479 = vmatmul.mubr.f32.gmra.mrb[0].mxu0 %v339
    %v480 = vpop.f32.mrb[0].mxu0
    %v481 = vadd.f32 %v387, %v480
    %v482 = vpop.f32.mrb[0].mxu0
    %483 = vmatprep.mubr.f32.mxu0 0.0
    %484 = vmatmul.mubr.f32.gmra.mrb[0].mxu0 %v340
    %v485 = vpop.f32.mrb[0].mxu0
    %v486 = vadd.f32 %v387, %v485
    %v487 = vpop.f32.mrb[0].mxu0
    %488 = vmatprep.mubr.f32.mxu0 0.0
    %489 = vmatmul.mubr.f32.gmra.mrb[0].mxu0 %v341
    %v490 = vpop.f32.mrb[0].mxu0
    %v491 = vadd.f32 %v387, %v490
    %v492 = vpop.f32.mrb[0].mxu0
    %493 = vmatprep.mubr.f32.mxu0 0.0
    %494 = vmatmul.mubr.f32.gmra.mrb[0].mxu0 %v342
    %v495 = vpop.f32.mrb[0].mxu0
    %v496 = vadd.f32 %v387, %v495
    %v497 = vpop.f32.mrb[0].mxu0
    %498 = vmatprep.mubr.f32.mxu0 0.0
    %499 = vmatmul.mubr.f32.gmra.mrb[0].mxu0 %v343
    %v500 = vpop.f32.mrb[0].mxu0
    %v501 = vadd.f32 %v387, %v500
    %v502 = vpop.f32.mrb[0].mxu0
    %503 = vmatprep.mubr.f32.mxu0 0.0
    %504 = vmatmul.mubr.f32.gmra.mrb[0].mxu0 %v344
    %v505 = vpop.f32.mrb[0].mxu0
    %v506 = vadd.f32 %v387, %v505
    %v507 = vpop.f32.mrb[0].mxu0
    %508 = vmatprep.mubr.f32.mxu0 0.0
    %509 = vmatmul.mubr.f32.gmra.mrb[0].mxu0 %v345
    %v510 = vpop.f32.mrb[0].mxu0
    %v511 = vadd.f32 %v387, %v510
    %v512 = vpop.f32.mrb[0].mxu0
    %513 = vmatprep.mubr.f32.mxu0 0.0
    %514 = vmatmul.mubr.f32.gmra.mrb[0].mxu0 %v346
    %v515 = vpop.f32.mrb[0].mxu0
    %v516 = vadd.f32 %v387, %v515
    %v517 = vpop.f32.mrb[0].mxu0
    %518 = vmatprep.mubr.f32.mxu0 0.0
    %519 = vmatmul.mubr.f32.gmra.mrb[0].mxu0 %v347
    %v520 = vpop.f32.mrb[0].mxu0
    %v521 = vadd.f32 %v387, %v520
    %v522 = vpop.f32.mrb[0].mxu0
    %523 = vmatprep.mubr.f32.mxu0 0.0
    %524 = vmatmul.mubr.f32.gmra.mrb[0].mxu0 %v348
    %v525 = vpop.f32.mrb[0].mxu0
    %v526 = vadd.f32 %v387, %v525
    %v527 = vpop.f32.mrb[0].mxu0
    %528 = vmatprep.mubr.f32.mxu0 0.0
    %529 = vmatmul.mubr.f32.gmra.mrb[0].mxu0 %v349
    %v530 = vpop.f32.mrb[0].mxu0
    %v531 = vadd.f32 %v387, %v530
    %v532 = vpop.f32.mrb[0].mxu0
    %533 = vmatprep.mubr.f32.mxu0 0.0
    %534 = vmatmul.mubr.f32.gmra.mrb[0].mxu0 %v350
    %v535 = vpop.f32.mrb[0].mxu0
    %v536 = vadd.f32 %v387, %v535
    %v537 = vpop.f32.mrb[0].mxu0
    %538 = vmatprep.mubr.f32.mxu0 0.0
    %539 = vmatmul.mubr.f32.gmra.mrb[0].mxu0 %v351
    %v540 = vpop.f32.mrb[0].mxu0
    %v541 = vadd.f32 %v387, %v540
    %v542 = vpop.f32.mrb[0].mxu0
    %543 = vmatprep.mubr.f32.mxu0 0.0
    %544 = vmatmul.mubr.f32.gmra.mrb[0].mxu0 %v352
    %v545 = vpop.f32.mrb[0].mxu0
    %v546 = vadd.f32 %v387, %v545
    %v547 = vpop.f32.mrb[0].mxu0
    %548 = vmatprep.mubr.f32.mxu0 0.0
    %549 = vmatmul.mubr.f32.gmra.mrb[0].mxu0 %v353
    %v550 = vpop.f32.mrb[0].mxu0
    %v551 = vadd.f32 %v387, %v550
    %v552 = vpop.f32.mrb[0].mxu0
    %553 = vmatprep.mubr.f32.mxu0 0.0
    %554 = vmatmul.mubr.f32.gmra.mrb[0].mxu0 %v354
    %v555 = vpop.f32.mrb[0].mxu0
    %v556 = vadd.f32 %v387, %v555
    %v557 = vpop.f32.mrb[0].mxu0
    %558 = vmatprep.mubr.f32.mxu0 0.0
    %559 = vmatmul.mubr.f32.gmra.mrb[0].mxu0 %v355
    %v560 = vpop.f32.mrb[0].mxu0
    %v561 = vadd.f32 %v387, %v560
    %v562 = vpop.f32.mrb[0].mxu0
    %563 = vmatprep.mubr.f32.mxu0 0.0
    %564 = vmatmul.mubr.f32.gmra.mrb[0].mxu0 %v356
    %v565 = vpop.f32.mrb[0].mxu0
    %v566 = vadd.f32 %v387, %v565
    %v567 = vpop.f32.mrb[0].mxu0
    %568 = vmatprep.mubr.f32.mxu0 0.0
    %569 = vmatmul.mubr.f32.gmra.mrb[0].mxu0 %v357
    %v570 = vpop.f32.mrb[0].mxu0
    %v571 = vadd.f32 %v387, %v570
    %v572 = vpop.f32.mrb[0].mxu0
    %573 = vmatprep.mubr.f32.mxu0 0.0
    %574 = vmatmul.mubr.f32.gmra.mrb[0].mxu0 %v358
    %v575 = vpop.f32.mrb[0].mxu0
    %v576 = vadd.f32 %v387, %v575
    %v577 = vpop.f32.mrb[0].mxu0
    %578 = vmatprep.mubr.f32.mxu0 0.0
    %579 = vmatmul.mubr.f32.gmra.mrb[0].mxu0 %v359
    %v580 = vpop.f32.mrb[0].mxu0
    %v581 = vadd.f32 %v387, %v580
    %v582 = vpop.f32.mrb[0].mxu0
    %583 = vmatprep.mubr.f32.mxu0 0.0
    %584 = vmatmul.mubr.f32.gmra.mrb[0].mxu0 %v360
    %v585 = vpop.f32.mrb[0].mxu0
    %v586 = vadd.f32 %v387, %v585
    %v587 = vpop.f32.mrb[0].mxu0
    %588 = vmatprep.mubr.f32.mxu0 0.0
    %589 = vmatmul.mubr.f32.gmra.mrb[0].mxu0 %v361
    %v590 = vpop.f32.mrb[0].mxu0
    %v591 = vadd.f32 %v387, %v590
    %v592 = vpop.f32.mrb[0].mxu0
    %593 = vmatprep.mubr.f32.mxu0 0.0
    %594 = vmatmul.mubr.f32.gmra.mrb[0].mxu0 %v362
    %v595 = vpop.f32.mrb[0].mxu0
    %v596 = vadd.f32 %v387, %v595
    %v597 = vpop.f32.mrb[0].mxu0
    %598 = vmatprep.mubr.f32.mxu0 0.0
    %599 = vmatmul.mubr.f32.gmra.mrb[0].mxu0 %v363
    %v600 = vpop.f32.mrb[0].mxu0
    %v601 = vadd.f32 %v387, %v600
    %v602 = vpop.f32.mrb[0].mxu0
    %603 = vmatprep.mubr.f32.mxu0 0.0
    %604 = vmatmul.mubr.f32.gmra.mrb[0].mxu0 %v364
    %v605 = vpop.f32.mrb[0].mxu0
    %v606 = vadd.f32 %v387, %v605
    %v607 = vpop.f32.mrb[0].mxu0
    %608 = vmatprep.mubr.f32.mxu0 0.0
    %609 = vmatmul.mubr.f32.gmra.mrb[0].mxu0 %v365
    %v610 = vpop.f32.mrb[0].mxu0
    %v611 = vadd.f32 %v387, %v610
    %v612 = vpop.f32.mrb[0].mxu0
    %613 = vdwg.mxu0
    %v614 = vmax.f32 %v456, 0.0
    %v615 = vmax.f32 %v461, 0.0
    %v616 = vmax.f32 %v466, 0.0
    %v617 = vmax.f32 %v471, 0.0
    %v618 = vmax.f32 %v476, 0.0
    %v619 = vmax.f32 %v481, 0.0
    %v620 = vmax.f32 %v486, 0.0
    %v621 = vmax.f32 %v491, 0.0
    %v622 = vmax.f32 %v496, 0.0
    %v623 = vmax.f32 %v501, 0.0
    %v624 = vmax.f32 %v506, 0.0
    %v625 = vmax.f32 %v511, 0.0
    %v626 = vmax.f32 %v516, 0.0
    %v627 = vmax.f32 %v521, 0.0
    %v628 = vmax.f32 %v526, 0.0
    %v629 = vmax.f32 %v531, 0.0
    %v630 = vmax.f32 %v536, 0.0
    %v631 = vmax.f32 %v541, 0.0
    %v632 = vmax.f32 %v546, 0.0
    %v633 = vmax.f32 %v551, 0.0
    %v634 = vmax.f32 %v556, 0.0
    %v635 = vmax.f32 %v561, 0.0
    %v636 = vmax.f32 %v566, 0.0
    %v637 = vmax.f32 %v571, 0.0
    %v638 = vmax.f32 %v576, 0.0
    %v639 = vmax.f32 %v581, 0.0
    %v640 = vmax.f32 %v586, 0.0
    %v641 = vmax.f32 %v591, 0.0
    %v642 = vmax.f32 %v596, 0.0
    %v643 = vmax.f32 %v601, 0.0
    %v644 = vmax.f32 %v606, 0.0
    %v645 = vmax.f32 %v611, 0.0
    %v646 = vld [vmem:[%s5] sm:$0xff]
    %v647 = vld [vmem:[%s5 + $0x8] sm:$0xff]
    %v648 = vld [vmem:[%s5 + $0x10] sm:$0xff]
    %v649 = vld [vmem:[%s5 + $0x18] sm:$0xff]
    %v650 = vld [vmem:[%s5 + $0x20] sm:$0xff]
    %v651 = vld [vmem:[%s5 + $0x28] sm:$0xff]
    %v652 = vld [vmem:[%s5 + $0x30] sm:$0xff]
    %v653 = vld [vmem:[%s5 + $0x38] sm:$0xff]
    %v654 = vld [vmem:[%s5 + $0x40] sm:$0xff]
    %v655 = vld [vmem:[%s5 + $0x48] sm:$0xff]
    %v656 = vld [vmem:[%s5 + $0x50] sm:$0xff]
    %v657 = vld [vmem:[%s5 + $0x58] sm:$0xff]
    %v658 = vld [vmem:[%s5 + $0x60] sm:$0xff]
    %v659 = vld [vmem:[%s5 + $0x68] sm:$0xff]
    %v660 = vld [vmem:[%s5 + $0x70] sm:$0xff]
    %v661 = vld [vmem:[%s5 + $0x78] sm:$0xff]
    %v662 = vld [vmem:[%s6] sm:$0x1]
    %v664 = vlaneseq
    %v665 = vshrl.u32 %v664, 7
    %v666 = vsub.s32 0, %v665
    %v667 = vrot.slane %v662, %v666
    %669 = vmatprep.subr.mxu0 0.0
    %670 = vmatpush1.msra.mxu0 %v646
    %671 = vmatprep.subr.mxu0 0.0
    %672 = vmatpush1.msra.mxu0 %v647
    %673 = vmatprep.subr.mxu0 0.0
    %674 = vmatpush1.msra.mxu0 %v648
    %675 = vmatprep.subr.mxu0 0.0
    %676 = vmatpush1.msra.mxu0 %v649
    %677 = vmatprep.subr.mxu0 0.0
    %678 = vmatpush1.msra.mxu0 %v650
    %679 = vmatprep.subr.mxu0 0.0
    %680 = vmatpush1.msra.mxu0 %v651
    %681 = vmatprep.subr.mxu0 0.0
    %682 = vmatpush1.msra.mxu0 %v652
    %683 = vmatprep.subr.mxu0 0.0
    %684 = vmatpush1.msra.mxu0 %v653
    %685 = vmatprep.subr.mxu0 0.0
    %686 = vmatpush1.msra.mxu0 %v654
    %687 = vmatprep.subr.mxu0 0.0
    %688 = vmatpush1.msra.mxu0 %v655
    %689 = vmatprep.subr.mxu0 0.0
    %690 = vmatpush1.msra.mxu0 %v656
    %691 = vmatprep.subr.mxu0 0.0
    %692 = vmatpush1.msra.mxu0 %v657
    %693 = vmatprep.subr.mxu0 0.0
    %694 = vmatpush1.msra.mxu0 %v658
    %695 = vmatprep.subr.mxu0 0.0
    %696 = vmatpush1.msra.mxu0 %v659
    %697 = vmatprep.subr.mxu0 0.0
    %698 = vmatpush1.msra.mxu0 %v660
    %699 = vmatprep.subr.mxu0 0.0
    %700 = vmatpush1.msra.mxu0 %v661
    %701 = vmatprep.subr.mxu0 0.0
    %702 = vmatpush1.msra.mxu0 0.0
    %703 = vmatprep.subr.mxu0 0.0
    %704 = vmatpush1.msra.mxu0 0.0
    %705 = vmatprep.subr.mxu0 0.0
    %706 = vmatpush1.msra.mxu0 0.0
    %707 = vmatprep.subr.mxu0 0.0
    %708 = vmatpush1.msra.mxu0 0.0
    %709 = vmatprep.subr.mxu0 0.0
    %710 = vmatpush1.msra.mxu0 0.0
    %711 = vmatprep.subr.mxu0 0.0
    %712 = vmatpush1.msra.mxu0 0.0
    %713 = vmatprep.subr.mxu0 0.0
    %714 = vmatpush1.msra.mxu0 0.0
    %715 = vmatprep.subr.mxu0 0.0
    %716 = vmatpush1.msra.mxu0 0.0
    %717 = vmatprep.subr.mxu0 0.0
    %718 = vmatpush1.msra.mxu0 0.0
    %719 = vmatprep.subr.mxu0 0.0
    %720 = vmatpush1.msra.mxu0 0.0
    %721 = vmatprep.subr.mxu0 0.0
    %722 = vmatpush1.msra.mxu0 0.0
    %723 = vmatprep.subr.mxu0 0.0
    %724 = vmatpush1.msra.mxu0 0.0
    %725 = vmatprep.subr.mxu0 0.0
    %726 = vmatpush1.msra.mxu0 0.0
    %727 = vmatprep.subr.mxu0 0.0
    %728 = vmatpush1.msra.mxu0 0.0
    %729 = vmatprep.subr.mxu0 0.0
    %730 = vmatpush1.msra.mxu0 0.0
    %731 = vmatprep.subr.mxu0 0.0
    %732 = vmatpush1.msra.mxu0 0.0
    %733 = vmatprep.mubr.f32.mxu0 0.0
    %734 = vmatmul.mubr.f32.gmra.mrb[0].mxu0 %v614
    %v735 = vpop.f32.mrb[0].mxu0
    %v736 = vadd.f32 %v667, %v735
    %v737 = vpop.f32.mrb[0].mxu0
    %738 = vmatprep.mubr.f32.mxu0 0.0
    %739 = vmatmul.mubr.f32.gmra.mrb[0].mxu0 %v615
    %v740 = vpop.f32.mrb[0].mxu0
    %v741 = vadd.f32 %v667, %v740
    %v742 = vpop.f32.mrb[0].mxu0
    %743 = vmatprep.mubr.f32.mxu0 0.0
    %744 = vmatmul.mubr.f32.gmra.mrb[0].mxu0 %v616
    %v745 = vpop.f32.mrb[0].mxu0
    %v746 = vadd.f32 %v667, %v745
    %v747 = vpop.f32.mrb[0].mxu0
    %748 = vmatprep.mubr.f32.mxu0 0.0
    %749 = vmatmul.mubr.f32.gmra.mrb[0].mxu0 %v617
    %v750 = vpop.f32.mrb[0].mxu0
    %v751 = vadd.f32 %v667, %v750
    %v752 = vpop.f32.mrb[0].mxu0
    %753 = vmatprep.mubr.f32.mxu0 0.0
    %754 = vmatmul.mubr.f32.gmra.mrb[0].mxu0 %v618
    %v755 = vpop.f32.mrb[0].mxu0
    %v756 = vadd.f32 %v667, %v755
    %v757 = vpop.f32.mrb[0].mxu0
    %758 = vmatprep.mubr.f32.mxu0 0.0
    %759 = vmatmul.mubr.f32.gmra.mrb[0].mxu0 %v619
    %v760 = vpop.f32.mrb[0].mxu0
    %v761 = vadd.f32 %v667, %v760
    %v762 = vpop.f32.mrb[0].mxu0
    %763 = vmatprep.mubr.f32.mxu0 0.0
    %764 = vmatmul.mubr.f32.gmra.mrb[0].mxu0 %v620
    %v765 = vpop.f32.mrb[0].mxu0
    %v766 = vadd.f32 %v667, %v765
    %v767 = vpop.f32.mrb[0].mxu0
    %768 = vmatprep.mubr.f32.mxu0 0.0
    %769 = vmatmul.mubr.f32.gmra.mrb[0].mxu0 %v621
    %v770 = vpop.f32.mrb[0].mxu0
    %v771 = vadd.f32 %v667, %v770
    %v772 = vpop.f32.mrb[0].mxu0
    %773 = vmatprep.mubr.f32.mxu0 0.0
    %774 = vmatmul.mubr.f32.gmra.mrb[0].mxu0 %v622
    %v775 = vpop.f32.mrb[0].mxu0
    %v776 = vadd.f32 %v667, %v775
    %v777 = vpop.f32.mrb[0].mxu0
    %778 = vmatprep.mubr.f32.mxu0 0.0
    %779 = vmatmul.mubr.f32.gmra.mrb[0].mxu0 %v623
    %v780 = vpop.f32.mrb[0].mxu0
    %v781 = vadd.f32 %v667, %v780
    %v782 = vpop.f32.mrb[0].mxu0
    %783 = vmatprep.mubr.f32.mxu0 0.0
    %784 = vmatmul.mubr.f32.gmra.mrb[0].mxu0 %v624
    %v785 = vpop.f32.mrb[0].mxu0
    %v786 = vadd.f32 %v667, %v785
    %v787 = vpop.f32.mrb[0].mxu0
    %788 = vmatprep.mubr.f32.mxu0 0.0
    %789 = vmatmul.mubr.f32.gmra.mrb[0].mxu0 %v625
    %v790 = vpop.f32.mrb[0].mxu0
    %v791 = vadd.f32 %v667, %v790
    %v792 = vpop.f32.mrb[0].mxu0
    %793 = vmatprep.mubr.f32.mxu0 0.0
    %794 = vmatmul.mubr.f32.gmra.mrb[0].mxu0 %v626
    %v795 = vpop.f32.mrb[0].mxu0
    %v796 = vadd.f32 %v667, %v795
    %v797 = vpop.f32.mrb[0].mxu0
    %798 = vmatprep.mubr.f32.mxu0 0.0
    %799 = vmatmul.mubr.f32.gmra.mrb[0].mxu0 %v627
    %v800 = vpop.f32.mrb[0].mxu0
    %v801 = vadd.f32 %v667, %v800
    %v802 = vpop.f32.mrb[0].mxu0
    %803 = vmatprep.mubr.f32.mxu0 0.0
    %804 = vmatmul.mubr.f32.gmra.mrb[0].mxu0 %v628
    %v805 = vpop.f32.mrb[0].mxu0
    %v806 = vadd.f32 %v667, %v805
    %v807 = vpop.f32.mrb[0].mxu0
    %808 = vmatprep.mubr.f32.mxu0 0.0
    %809 = vmatmul.mubr.f32.gmra.mrb[0].mxu0 %v629
    %v810 = vpop.f32.mrb[0].mxu0
    %v811 = vadd.f32 %v667, %v810
    %v812 = vpop.f32.mrb[0].mxu0
    %813 = vmatprep.mubr.f32.mxu0 0.0
    %814 = vmatmul.mubr.f32.gmra.mrb[0].mxu0 %v630
    %v815 = vpop.f32.mrb[0].mxu0
    %v816 = vadd.f32 %v667, %v815
    %v817 = vpop.f32.mrb[0].mxu0
    %818 = vmatprep.mubr.f32.mxu0 0.0
    %819 = vmatmul.mubr.f32.gmra.mrb[0].mxu0 %v631
    %v820 = vpop.f32.mrb[0].mxu0
    %v821 = vadd.f32 %v667, %v820
    %v822 = vpop.f32.mrb[0].mxu0
    %823 = vmatprep.mubr.f32.mxu0 0.0
    %824 = vmatmul.mubr.f32.gmra.mrb[0].mxu0 %v632
    %v825 = vpop.f32.mrb[0].mxu0
    %v826 = vadd.f32 %v667, %v825
    %v827 = vpop.f32.mrb[0].mxu0
    %828 = vmatprep.mubr.f32.mxu0 0.0
    %829 = vmatmul.mubr.f32.gmra.mrb[0].mxu0 %v633
    %v830 = vpop.f32.mrb[0].mxu0
    %v831 = vadd.f32 %v667, %v830
    %v832 = vpop.f32.mrb[0].mxu0
    %833 = vmatprep.mubr.f32.mxu0 0.0
    %834 = vmatmul.mubr.f32.gmra.mrb[0].mxu0 %v634
    %v835 = vpop.f32.mrb[0].mxu0
    %v836 = vadd.f32 %v667, %v835
    %v837 = vpop.f32.mrb[0].mxu0
    %838 = vmatprep.mubr.f32.mxu0 0.0
    %839 = vmatmul.mubr.f32.gmra.mrb[0].mxu0 %v635
    %v840 = vpop.f32.mrb[0].mxu0
    %v841 = vadd.f32 %v667, %v840
    %v842 = vpop.f32.mrb[0].mxu0
    %843 = vmatprep.mubr.f32.mxu0 0.0
    %844 = vmatmul.mubr.f32.gmra.mrb[0].mxu0 %v636
    %v845 = vpop.f32.mrb[0].mxu0
    %v846 = vadd.f32 %v667, %v845
    %v847 = vpop.f32.mrb[0].mxu0
    %848 = vmatprep.mubr.f32.mxu0 0.0
    %849 = vmatmul.mubr.f32.gmra.mrb[0].mxu0 %v637
    %v850 = vpop.f32.mrb[0].mxu0
    %v851 = vadd.f32 %v667, %v850
    %v852 = vpop.f32.mrb[0].mxu0
    %853 = vmatprep.mubr.f32.mxu0 0.0
    %854 = vmatmul.mubr.f32.gmra.mrb[0].mxu0 %v638
    %v855 = vpop.f32.mrb[0].mxu0
    %v856 = vadd.f32 %v667, %v855
    %v857 = vpop.f32.mrb[0].mxu0
    %858 = vmatprep.mubr.f32.mxu0 0.0
    %859 = vmatmul.mubr.f32.gmra.mrb[0].mxu0 %v639
    %v860 = vpop.f32.mrb[0].mxu0
    %v861 = vadd.f32 %v667, %v860
    %v862 = vpop.f32.mrb[0].mxu0
    %863 = vmatprep.mubr.f32.mxu0 0.0
    %864 = vmatmul.mubr.f32.gmra.mrb[0].mxu0 %v640
    %v865 = vpop.f32.mrb[0].mxu0
    %v866 = vadd.f32 %v667, %v865
    %v867 = vpop.f32.mrb[0].mxu0
    %868 = vmatprep.mubr.f32.mxu0 0.0
    %869 = vmatmul.mubr.f32.gmra.mrb[0].mxu0 %v641
    %v870 = vpop.f32.mrb[0].mxu0
    %v871 = vadd.f32 %v667, %v870
    %v872 = vpop.f32.mrb[0].mxu0
    %873 = vmatprep.mubr.f32.mxu0 0.0
    %874 = vmatmul.mubr.f32.gmra.mrb[0].mxu0 %v642
    %v875 = vpop.f32.mrb[0].mxu0
    %v876 = vadd.f32 %v667, %v875
    %v877 = vpop.f32.mrb[0].mxu0
    %878 = vmatprep.mubr.f32.mxu0 0.0
    %879 = vmatmul.mubr.f32.gmra.mrb[0].mxu0 %v643
    %v880 = vpop.f32.mrb[0].mxu0
    %v881 = vadd.f32 %v667, %v880
    %v882 = vpop.f32.mrb[0].mxu0
    %883 = vmatprep.mubr.f32.mxu0 0.0
    %884 = vmatmul.mubr.f32.gmra.mrb[0].mxu0 %v644
    %v885 = vpop.f32.mrb[0].mxu0
    %v886 = vadd.f32 %v667, %v885
    %v887 = vpop.f32.mrb[0].mxu0
    %888 = vmatprep.mubr.f32.mxu0 0.0
    %889 = vmatmul.mubr.f32.gmra.mrb[0].mxu0 %v645
    %v890 = vpop.f32.mrb[0].mxu0
    %v891 = vadd.f32 %v667, %v890
    %v892 = vpop.f32.mrb[0].mxu0
    %893 = vdwg.mxu0
    %vm894 = vcmask 261120
    %895 = vst.msk [vmem:[%s7] sm:$0xff] %vm894, %v736
    %896 = vst.msk [vmem:[%s7 + $0x8] sm:$0xff] %vm894, %v741
    %897 = vst.msk [vmem:[%s7 + $0x10] sm:$0xff] %vm894, %v746
    %898 = vst.msk [vmem:[%s7 + $0x18] sm:$0xff] %vm894, %v751
    %899 = vst.msk [vmem:[%s7 + $0x20] sm:$0xff] %vm894, %v756
    %900 = vst.msk [vmem:[%s7 + $0x28] sm:$0xff] %vm894, %v761
    %901 = vst.msk [vmem:[%s7 + $0x30] sm:$0xff] %vm894, %v766
    %902 = vst.msk [vmem:[%s7 + $0x38] sm:$0xff] %vm894, %v771
    %903 = vst.msk [vmem:[%s7 + $0x40] sm:$0xff] %vm894, %v776
    %904 = vst.msk [vmem:[%s7 + $0x48] sm:$0xff] %vm894, %v781
    %905 = vst.msk [vmem:[%s7 + $0x50] sm:$0xff] %vm894, %v786
    %906 = vst.msk [vmem:[%s7 + $0x58] sm:$0xff] %vm894, %v791
    %907 = vst.msk [vmem:[%s7 + $0x60] sm:$0xff] %vm894, %v796
    %908 = vst.msk [vmem:[%s7 + $0x68] sm:$0xff] %vm894, %v801
    %909 = vst.msk [vmem:[%s7 + $0x70] sm:$0xff] %vm894, %v806
    %910 = vst.msk [vmem:[%s7 + $0x78] sm:$0xff] %vm894, %v811
    %911 = vst.msk [vmem:[%s7 + $0x80] sm:$0xff] %vm894, %v816
    %912 = vst.msk [vmem:[%s7 + $0x88] sm:$0xff] %vm894, %v821
    %913 = vst.msk [vmem:[%s7 + $0x90] sm:$0xff] %vm894, %v826
    %914 = vst.msk [vmem:[%s7 + $0x98] sm:$0xff] %vm894, %v831
    %915 = vst.msk [vmem:[%s7 + $0xa0] sm:$0xff] %vm894, %v836
    %916 = vst.msk [vmem:[%s7 + $0xa8] sm:$0xff] %vm894, %v841
    %917 = vst.msk [vmem:[%s7 + $0xb0] sm:$0xff] %vm894, %v846
    %918 = vst.msk [vmem:[%s7 + $0xb8] sm:$0xff] %vm894, %v851
    %919 = vst.msk [vmem:[%s7 + $0xc0] sm:$0xff] %vm894, %v856
    %920 = vst.msk [vmem:[%s7 + $0xc8] sm:$0xff] %vm894, %v861
    %921 = vst.msk [vmem:[%s7 + $0xd0] sm:$0xff] %vm894, %v866
    %922 = vst.msk [vmem:[%s7 + $0xd8] sm:$0xff] %vm894, %v871
    %923 = vst.msk [vmem:[%s7 + $0xe0] sm:$0xff] %vm894, %v876
    %924 = vst.msk [vmem:[%s7 + $0xe8] sm:$0xff] %vm894, %v881
    %925 = vst.msk [vmem:[%s7 + $0xf0] sm:$0xff] %vm894, %v886
    %926 = vst.msk [vmem:[%s7 + $0xf8] sm:$0xff] %vm894, %v891
    // Predicated region
    $region38: #{tpu_custom_call.1} parent=1 // pred_check
      _
    $region39: #{tpu_custom_call.1} parent=1 // pred_check_branch
      %928 = sbr.rel (0) target = $region41
    $region40: #{tpu_custom_call.1} parent=1 // pred_region
      _
    $region41: #{tpu_custom_call.1} parent=1 // pred_fallthru
      _
    // Predicated region
    $region42: #{tpu_custom_call.1} parent=1 // pred_check
      _
    $region43: #{tpu_custom_call.1} parent=1 // pred_check_branch
      %930 = sbr.rel (0) target = $region45
    $region44: #{tpu_custom_call.1} parent=1 // pred_region
      _
    $region45: #{tpu_custom_call.1} parent=1 // pred_fallthru
      _
    %931 = vsyncpa [#allocation3], 1
    %932 = vsyncpa [#allocation5], 1

</llo_original>
